<compile_context>
chip_gen: v7x
topology: tpu7x:2x2x1
jax: 0.10.0
libtpu: 0.0.40
codegen_flags: <defaults>
</compile_context>

<pallas_src>
import functools

import jax
import jax.numpy as jnp
from jax.experimental import pallas as pl
from jax.experimental.pallas import tpu as pltpu


def _round_up(x, m):
    return ((x + m - 1) // m) * m


def _round_down(x, m):
    return (x // m) * m


# ----------------------------- Pallas kernel --------------------------------
def _complex_block_mm_kernel(w_ref, p_ref, b_ref, o_ref):
    """out_T tile (n_out, TM) += W tile (n_out, TK) @ patches tile (TK, TM)."""
    kk = pl.program_id(1)

    @pl.when(kk == 0)
    def _init():
        # Output block is resident across the K axis; seed it with the bias.
        o_ref[...] = jnp.broadcast_to(b_ref[...], o_ref.shape).astype(o_ref.dtype)

    o_ref[...] += jnp.dot(w_ref[...], p_ref[...],
                          preferred_element_type=jnp.float32)


def _spec(block_shape, index_map, *, single_buffer=False):
    """BlockSpec; optionally single-buffered (resident operand, constant map)."""
    if single_buffer and hasattr(pl, "Buffered"):
        try:
            return pl.BlockSpec(block_shape, index_map,
                                pipeline_mode=pl.Buffered(1))
        except TypeError:   # older jax without the pipeline_mode kwarg
            pass
    return pl.BlockSpec(block_shape, index_map)


def _complex_block_mm(w_blk, patches, b_blk, *, tm, tk, kt, vmem_limit_bytes):
    """w_blk: (n_out, kp) bf16; patches: (kp, m_pad) bf16; b_blk: (n_out, 1) f32.

    Returns out_T: (n_out, m_pad) f32 with kp = tk * kt and m_pad % tm == 0.
    """
    n_out, kp = w_blk.shape
    m_pad = patches.shape[1]
    assert kp == tk * kt and m_pad % tm == 0

    resident = (kt == 1)            # weight/bias fully resident -> 1 buffer
    grid = (m_pad // tm, kt)        # reduction (K) axis last

    return pl.pallas_call(
        _complex_block_mm_kernel,
        out_shape=jax.ShapeDtypeStruct((n_out, m_pad), jnp.float32),
        grid_spec=pltpu.PrefetchScalarGridSpec(
            num_scalar_prefetch=0,
            grid=grid,
            in_specs=[
                _spec((n_out, tk), lambda i, kk: (0, kk), single_buffer=resident),
                pl.BlockSpec((tk, tm), lambda i, kk: (kk, i)),
                _spec((n_out, 1), lambda i, kk: (0, 0), single_buffer=resident),
            ],
            out_specs=pl.BlockSpec((n_out, tm), lambda i, kk: (0, i)),
        ),
        compiler_params=pltpu.CompilerParams(
            dimension_semantics=("parallel", "arbitrary"),
            vmem_limit_bytes=vmem_limit_bytes),
    )(w_blk, patches, b_blk)


# ------------------------------ JAX glue -------------------------------------
def _im2col_t(x, kh, kw, stride, padding, dilation, oh, ow, k_pad, m_pad):
    """x: (N, C, H, W) -> patches_T: (k_pad, m_pad), channel-major K order.

    K ordering (c, i, j) matches w.reshape(c_out, C*kh*kw); M ordering is
    (n, oh, ow).  K / M zero-padding is folded into the same construction so
    XLA fuses it (no standalone pad pass over the big patch matrix).
    """
    n, c, h, w = x.shape
    xp = jnp.pad(x, ((0, 0), (0, 0), (padding, padding), (padding, padding)))
    xp = jnp.transpose(xp, (1, 0, 2, 3))            # (C, N, Hp, Wp): small copy
    cols = []
    for i in range(kh):
        for j in range(kw):
            r0, c0 = i * dilation, j * dilation
            cols.append(xp[:, :, r0:r0 + stride * (oh - 1) + 1:stride,
                               c0:c0 + stride * (ow - 1) + 1:stride])
    stacked = jnp.stack(cols, axis=1)               # (C, kh*kw, N, OH, OW)
    pt = stacked.reshape(c * kh * kw, n * oh * ow)  # (2K, M)
    pt = jnp.pad(pt, ((0, k_pad - c * kh * kw), (0, m_pad - n * oh * ow)))
    return pt


def complex_conv2d(x, w_r, w_i, b_r, b_i, *, stride=1, padding=0, dilation=1,
                   tm=512):
    """x: (N, 2, C_in, H, W);  w_*: (C_out, C_in, KH, KW);  b_*: (C_out,)."""
    n, two, c_in, h, w = x.shape
    assert two == 2
    c_out, _, kh, kw = w_r.shape
    k = c_in * kh * kw
    two_k, n_out = 2 * k, 2 * c_out

    oh = (h + 2 * padding - dilation * (kh - 1) - 1) // stride + 1
    ow = (w + 2 * padding - dilation * (kw - 1) - 1) // stride + 1
    m = n * oh * ow

    # ---- generation-aware VMEM budget --------------------------------------
    try:
        vmem_cap = int(pltpu.get_tpu_info().vmem_capacity_bytes)
    except Exception:
        vmem_cap = 64 << 20                           # conservative (v7x-sized)
    budget = (2 * vmem_cap) // 3       # ~43 MiB on v7x, ~85 MiB on v5e/v6e

    def _ws_bytes(tm_, tk_, w_bufs):
        w_b = w_bufs * 2 * n_out * _round_up(tk_, 128)      # bf16 weight tiles
        p_b = 2 * 2 * _round_up(tk_, 16) * tm_              # bf16 patches x2
        o_b = 2 * 4 * _round_up(n_out, 8) * tm_             # f32 output   x2
        b_b = 4 * _round_up(n_out, 8) * 128                 # f32 bias
        return w_b + p_b + o_b + b_b

    # ---- tile sizing --------------------------------------------------------
    tm = min(tm, _round_up(m, 128))
    # Keep >= ~4 M-steps so v7x's 2 TensorCores + writeback overlap engage.
    tm = min(tm, max(128, _round_down(max(m // 4, 128), 128)))
    tm = max(128, tm)

    tk, kt, w_bufs = _round_up(two_k, 16), 1, 1       # full-K, resident weight
    if _ws_bytes(tm, tk, 1) > budget:
        while tm > 128 and _ws_bytes(tm, tk, 1) > budget:
            tm = max(128, _round_down(tm // 2, 128))
        if _ws_bytes(tm, tk, 1) > budget:             # split contraction dim
            tk, w_bufs = 128, 2
            while 2 * tk < two_k and _ws_bytes(tm, 2 * tk, 2) <= budget:
                tk *= 2
            kt = pl.cdiv(two_k, tk)
    kp = tk * kt
    m_pad = _round_up(m, tm)
    vmem_limit = int(min(int(vmem_cap * 0.9),
                         max(32 << 20,
                             (_ws_bytes(tm, tk, w_bufs) * 3) // 2 + (4 << 20))))

    # ---- operands -----------------------------------------------------------
    # (real || imag)-channel concat, cast to bf16 *before* the im2col so the
    # whole patch construction moves half the bytes.
    x_cat = x.reshape(n, 2 * c_in, h, w).astype(jnp.bfloat16)
    patches = _im2col_t(x_cat, kh, kw, stride, padding, dilation,
                        oh, ow, kp, m_pad)                    # (kp, m_pad) bf16

    # Block-complex weight for the transposed GEMM:
    #   [[Wr, -Wi], [Wi, Wr]] @ [pr ; pi] = [Wr pr - Wi pi ; Wi pr + Wr pi]
    wr = w_r.reshape(c_out, k)
    wi = w_i.reshape(c_out, k)
    w_blk = jnp.concatenate(
        [jnp.concatenate([wr, -wi], axis=1),          # -> real output rows
         jnp.concatenate([wi, wr], axis=1)],          # -> imag output rows
        axis=0).astype(jnp.bfloat16)                  # (2*C_out, 2K)
    w_blk = jnp.pad(w_blk, ((0, 0), (0, kp - two_k)))
    b_blk = jnp.concatenate([b_r - b_i, b_r + b_i]).reshape(n_out, 1)
    b_blk = b_blk.astype(jnp.float32)

    out_t = _complex_block_mm(w_blk, patches, b_blk, tm=tm, tk=tk, kt=kt,
                              vmem_limit_bytes=vmem_limit)    # (n_out, m_pad)

    # (2*C_out, M) -> (N, 2, C_out, OH, OW); this copy is true-output sized.
    out = out_t[:, :m].reshape(2, c_out, n, oh, ow)
    return out.transpose(2, 0, 1, 3, 4)


# ------------------------------ reference ------------------------------------
def _conv2d_ref(x, w, b, stride, padding, dilation):
    out = jax.lax.conv_general_dilated(
        x, w, window_strides=(stride, stride),
        padding=[(padding, padding), (padding, padding)],
        rhs_dilation=(dilation, dilation),
        dimension_numbers=("NCHW", "OIHW", "NCHW"))
    return out + b[None, :, None, None]


def complex_conv2d_ref(x, w_r, w_i, b_r, b_i, *, stride=1, padding=0,
                       dilation=1):
    x_r, x_i = x[:, 0], x[:, 1]
    out_r = (_conv2d_ref(x_r, w_r, b_r, stride, padding, dilation)
             - _conv2d_ref(x_i, w_i, b_i, stride, padding, dilation))
    out_i = (_conv2d_ref(x_i, w_r, b_r, stride, padding, dilation)
             + _conv2d_ref(x_r, w_i, b_i, stride, padding, dilation))
    return jnp.stack([out_r, out_i], axis=1)


# --------------------------------- main ---------------------------------------
if __name__ == "__main__":
    # ComplexConv2d(in_channels=4, out_channels=8, kernel_size=3,
    #               stride=1, padding=0, dilation=1, groups=1, bias=True)
    N, C_IN, C_OUT, H, W, KS = 2, 4, 8, 16, 16, 3
    STRIDE, PAD, DIL = 1, 0, 1

    key = jax.random.PRNGKey(0)
    kx, kwr, kwi, kbr, kbi = jax.random.split(key, 5)

    x = jax.random.normal(kx, (N, 2, C_IN, H, W), dtype=jnp.float32)
    # Deterministic synthetic parameters (shapes match torch.nn.Conv2d).
    fan_in = C_IN * KS * KS
    bound = 1.0 / (fan_in ** 0.5)
    w_r = jax.random.uniform(kwr, (C_OUT, C_IN, KS, KS), jnp.float32,
                             -bound, bound)
    w_i = jax.random.uniform(kwi, (C_OUT, C_IN, KS, KS), jnp.float32,
                             -bound, bound)
    b_r = jax.random.uniform(kbr, (C_OUT,), jnp.float32, -bound, bound)
    b_i = jax.random.uniform(kbi, (C_OUT,), jnp.float32, -bound, bound)

    run = jax.jit(functools.partial(complex_conv2d, stride=STRIDE,
                                    padding=PAD, dilation=DIL))
    out = jax.block_until_ready(run(x, w_r, w_i, b_r, b_i))

    # Reference on bf16-quantized operands (the kernel computes bf16 x bf16
    # products with f32 accumulation), so agreement is tight.
    def q(a):
        return a.astype(jnp.bfloat16).astype(jnp.float32)

    ref = complex_conv2d_ref(q(x), q(w_r), q(w_i), b_r, b_i,
                             stride=STRIDE, padding=PAD, dilation=DIL)

    assert out.shape == ref.shape == (N, 2, C_OUT, H - KS + 1, W - KS + 1), out.shape
    max_err = float(jnp.max(jnp.abs(out - ref)))
    assert jnp.allclose(out, ref, atol=5e-3, rtol=5e-3), max_err

    print("KERNEL_OK")
</pallas_src>

<mosaic_0001>
module attributes {stable_mosaic.version = 11 : i64} {
  func.func @_complex_block_mm_kernel(%arg0: i32, %arg1: i32, %arg2: memref<16x80xbf16, #tpu.memory_space<vmem>>, %arg3: memref<80x128xbf16, #tpu.memory_space<vmem>>, %arg4: memref<16x1xf32, #tpu.memory_space<vmem>>, %arg5: memref<16x128xf32, #tpu.memory_space<vmem>>) attributes {dimension_semantics = [#tpu.dimension_semantics<parallel>, #tpu.dimension_semantics<arbitrary>], iteration_bounds = array<i64: 4, 1>, scalar_prefetch = 0 : i64, scratch_operands = 0 : i64, tpu.core_type = #tpu.core_type<tc>, window_params = [{pipeline_mode = #tpu.pipeline_mode<synchronous>, transform_indices = @transform_0, window_bounds = array<i64: 16, 80>}, {transform_indices = @transform_1, window_bounds = array<i64: 80, 128>}, {pipeline_mode = #tpu.pipeline_mode<synchronous>, transform_indices = @transform_2, window_bounds = array<i64: 16, 1>}, {transform_indices = @transform_3, window_bounds = array<i64: 16, 128>}]} {
    %c0_i32 = arith.constant 0 : i32
    %0 = arith.cmpi eq, %arg1, %c0_i32 : i32
    %1 = arith.extui %0 : i1 to i32
    %c0_i32_0 = arith.constant 0 : i32
    %2 = arith.cmpi ne, %1, %c0_i32_0 : i32
    scf.if %2 {
      %c0_8 = arith.constant 0 : index
      %c0_9 = arith.constant 0 : index
      %9 = vector.load %arg4[%c0_8, %c0_9] : memref<16x1xf32, #tpu.memory_space<vmem>>, vector<16x1xf32>
      %10 = vector.shape_cast %9 : vector<16x1xf32> to vector<16x1xf32>
      %11 = vector.broadcast %10 : vector<16x1xf32> to vector<16x128xf32>
      %c0_10 = arith.constant 0 : index
      %c0_11 = arith.constant 0 : index
      %12 = vector.load %arg5[%c0_10, %c0_11] : memref<16x128xf32, #tpu.memory_space<vmem>>, vector<16x128xf32>
      tpu.vector_store %arg5[%c0_10, %c0_11], %11 {strides = array<i32>} : memref<16x128xf32, #tpu.memory_space<vmem>>, vector<16x128xf32>,
    } else {
    }
    %c0 = arith.constant 0 : index
    %c0_1 = arith.constant 0 : index
    %3 = vector.load %arg5[%c0, %c0_1] : memref<16x128xf32, #tpu.memory_space<vmem>>, vector<16x128xf32>
    %c0_2 = arith.constant 0 : index
    %c0_3 = arith.constant 0 : index
    %4 = vector.load %arg2[%c0_2, %c0_3] : memref<16x80xbf16, #tpu.memory_space<vmem>>, vector<16x80xbf16>
    %c0_4 = arith.constant 0 : index
    %c0_5 = arith.constant 0 : index
    %5 = vector.load %arg3[%c0_4, %c0_5] : memref<80x128xbf16, #tpu.memory_space<vmem>>, vector<80x128xbf16>
    %cst = arith.constant dense<0.000000e+00> : vector<16x128xf32>
    %6 = tpu.matmul %4, %5, %cst {dimension_numbers = #tpu.dot_dimension_numbers<[1], [0], [0], [1], [0, 0, 1, 1], [], []>} : vector<16x80xbf16>, vector<80x128xbf16>, vector<16x128xf32> -> vector<16x128xf32>
    %7 = arith.addf %3, %6 : vector<16x128xf32>
    %c0_6 = arith.constant 0 : index
    %c0_7 = arith.constant 0 : index
    %8 = vector.load %arg5[%c0_6, %c0_7] : memref<16x128xf32, #tpu.memory_space<vmem>>, vector<16x128xf32>
    tpu.vector_store %arg5[%c0_6, %c0_7], %7 {strides = array<i32>} : memref<16x128xf32, #tpu.memory_space<vmem>>, vector<16x128xf32>,
    return
  }
  func.func @transform_0(%arg0: i32, %arg1: i32) -> (i32, i32) {
    %c0_i32 = arith.constant 0 : i32
    %c0_i32_0 = arith.constant 0 : i32
    return %c0_i32, %arg1 : i32, i32
  }
  func.func @transform_1(%arg0: i32, %arg1: i32) -> (i32, i32) {
    %c0_i32 = arith.constant 0 : i32
    return %arg1, %arg0 : i32, i32
  }
  func.func @transform_2(%arg0: i32, %arg1: i32) -> (i32, i32) {
    %c0_i32 = arith.constant 0 : i32
    %c0_i32_0 = arith.constant 0 : i32
    %c0_i32_1 = arith.constant 0 : i32
    return %c0_i32, %c0_i32_0 : i32, i32
  }
  func.func @transform_3(%arg0: i32, %arg1: i32) -> (i32, i32) {
    %c0_i32 = arith.constant 0 : i32
    %c0_i32_0 = arith.constant 0 : i32
    return %c0_i32, %arg0 : i32, i32
  }
}

</mosaic_0001>

<llo_original>
// kernel: complex_conv2d.1
$region0: #{complex_conv2d.1}
  #allocation0 [shape = 'u32[]', space=smem, size = 0x4, offset = 0x4, fixed_abs, tag = 'smem constant byte address 0x4 - core index']
  #allocation1 [shape = 'u32[144,128]{1,0:T(1,128)}', space=vmem, size = 0x12000, scoped, tag = 'internal scratch']
  %s0 = inlined_call_operand.vmem [shape: bf16[16,80], index: 0, kind: input, shape index: {}]
  %s1 = inlined_call_operand.vmem [shape: bf16[80,512], index: 1, kind: input, shape index: {}]
  %s2 = inlined_call_operand.vmem [shape: f32[16,1], index: 2, kind: input, shape index: {}]
  %s3 = inlined_call_operand.vmem [shape: f32[16,512], index: 3, kind: output, shape index: {}]
  %s4 = sld [smem:[#allocation0]]
  $region124: #{complex_conv2d.1} parent=0
    _
  %s6 = ssub.s32 1, %s4
  %s7 = scalar_select 0, %s6, %s4
  $region1: #{complex_conv2d.1} parent=0
    #allocation2 [shape = 'u8[40960]{0}', space=vmem, size = 0xa000, scoped, tag = 'input window, operand 1']
    #allocation3 [shape = 'u8[16384]{0}', space=vmem, size = 0x4000, scoped, tag = 'output window, operand 0']
    loop: start=0, step=1, limit=6
    $region2: #{complex_conv2d.1} parent=1 // loop_pre_header
      _
    $region3: #{complex_conv2d.1} parent=1 // loop_header
      %s9 = sphi 0, %s13
      %p10 = scmp.ge.s32.totalorder %s9, 6
      %s16 = sphi 0, %s28
      %s17 = sphi 0, %s24
      %s18 = sphi 0, %s16
      %s19 = sphi 0, %s17
      %s20 = sphi 0, %s18
      %s21 = sphi 0, %s19
      %s31 = sphi 0, %s33
      %s34 = sphi 0, %s31
      %s35 = sphi 0, %s34
      %s51 = sphi 0, %s35
      %s59 = sphi 0, %s61
      %s62 = sphi 0, %s59
      %s63 = sphi 0, %s62
      %s79 = sphi 0, %s63
      %s83 = sphi 0, %s83
      %s85 = sphi 0, %s83
      %s86 = sphi 0, %s85
      %s100 = sphi 0, %s86
      %s106 = sphi 0, %s108
      %s109 = sphi 0, %s106
      %s110 = sphi 0, %s109
      %s126 = sphi 0, %s110
    $region4: #{complex_conv2d.1} parent=1 // loop_header_branch
      %12 = sbr.rel (%p10) target = $region8
    $region5: #{complex_conv2d.1} parent=1 // loop_body
      %s14 = ssub.s32 %s9, 1
      %s15 = ssub.s32 %s9, 2
      %s22 = sadd.s32 1, %s17
      %p23 = scmp.ge.s32.totalorder %s22, 1
      %s24 = scalar_select %p23, 0, %s22
      %s25 = sadd.s32 1, %s16
      %s26 = scalar_select %p23, %s25, %s16
      %p27 = scmp.ge.s32.totalorder %s26, 4
      %s28 = scalar_select %p27, 0, %s26
      %s29 = ssub.s32 %s17, %s24
      %p30 = scmp.eq.s32.totalorder %s29, 0
      %s32 = sadd.s32 %s31, 1
      %s33 = scalar_select %p30, %s31, %s32
      %p36 = pneg %p30
      %p37 = scmp.eq.s32.totalorder %s9, 3
      %p38 = por %p36, %p37
      %p39 = scmp.ne.s32.totalorder %s31, %s34
      %p40 = scmp.eq.s32.totalorder %s9, 0
      %p41 = por %p39, %p40
      %p42 = scmp.ne.s32.totalorder %s31, %s34
      %p43 = scmp.eq.s32.totalorder %s14, 3
      %p44 = por %p42, %p43
      %p45 = scmp.ne.s32.totalorder %s34, %s35
      %p46 = scmp.eq.s32.totalorder %s14, 0
      %p47 = por %p45, %p46
      %p48 = scmp.ne.s32.totalorder %s34, %s35
      %p49 = scmp.eq.s32.totalorder %s15, 3
      %p50 = por %p48, %p49
      %p52 = scmp.ne.s32.totalorder %s35, %s51
      %p53 = scmp.eq.s32.totalorder %s15, 0
      %p54 = por %p52, %p53
      %s55 = ssub.s32 %s17, %s24
      %s56 = ssub.s32 %s16, %s28
      %s57 = sor.u32 %s55, %s56
      %p58 = scmp.eq.s32.totalorder %s57, 0
      %s60 = sadd.s32 %s59, 1
      %s61 = scalar_select %p58, %s59, %s60
      %p64 = pneg %p58
      %p65 = scmp.eq.s32.totalorder %s9, 3
      %p66 = por %p64, %p65
      %p67 = scmp.ne.s32.totalorder %s59, %s62
      %p68 = scmp.eq.s32.totalorder %s9, 0
      %p69 = por %p67, %p68
      %p70 = scmp.ne.s32.totalorder %s59, %s62
      %p71 = scmp.eq.s32.totalorder %s14, 3
      %p72 = por %p70, %p71
      %p73 = scmp.ne.s32.totalorder %s62, %s63
      %p74 = scmp.eq.s32.totalorder %s14, 0
      %p75 = por %p73, %p74
      %p76 = scmp.ne.s32.totalorder %s62, %s63
      %p77 = scmp.eq.s32.totalorder %s15, 3
      %p78 = por %p76, %p77
      %p80 = scmp.ne.s32.totalorder %s63, %s79
      %p81 = scmp.eq.s32.totalorder %s15, 0
      %p82 = por %p80, %p81
      %s84 = sadd.s32 %s83, 1
      %p87 = scmp.eq.s32.totalorder %s9, 3
      %p88 = scmp.ne.s32.totalorder %s83, %s85
      %p89 = scmp.eq.s32.totalorder %s9, 0
      %p90 = por %p88, %p89
      %p91 = scmp.ne.s32.totalorder %s83, %s85
      %p92 = scmp.eq.s32.totalorder %s14, 3
      %p93 = por %p91, %p92
      %p94 = scmp.ne.s32.totalorder %s85, %s86
      %p95 = scmp.eq.s32.totalorder %s14, 0
      %p96 = por %p94, %p95
      %p97 = scmp.ne.s32.totalorder %s85, %s86
      %p98 = scmp.eq.s32.totalorder %s15, 3
      %p99 = por %p97, %p98
      %p101 = scmp.ne.s32.totalorder %s86, %s100
      %p102 = scmp.eq.s32.totalorder %s15, 0
      %p103 = por %p101, %p102
      %s104 = ssub.s32 %s16, %s28
      %p105 = scmp.eq.s32.totalorder %s104, 0
      %s107 = sadd.s32 %s106, 1
      %s108 = scalar_select %p105, %s106, %s107
      %p111 = pneg %p105
      %p112 = scmp.eq.s32.totalorder %s9, 3
      %p113 = por %p111, %p112
      %p114 = scmp.ne.s32.totalorder %s106, %s109
      %p115 = scmp.eq.s32.totalorder %s9, 0
      %p116 = por %p114, %p115
      %p117 = scmp.ne.s32.totalorder %s106, %s109
      %p118 = scmp.eq.s32.totalorder %s14, 3
      %p119 = por %p117, %p118
      %p120 = scmp.ne.s32.totalorder %s109, %s110
      %p121 = scmp.eq.s32.totalorder %s14, 0
      %p122 = por %p120, %p121
      %p123 = scmp.ne.s32.totalorder %s109, %s110
      %p124 = scmp.eq.s32.totalorder %s15, 3
      %p125 = por %p123, %p124
      %p127 = scmp.ne.s32.totalorder %s110, %s126
      %p128 = scmp.eq.s32.totalorder %s15, 0
      %p129 = por %p127, %p128
      %p130 = scmp.le.s32.totalorder 1, %s9
      %p131 = scmp.lt.s32.totalorder %s9, 5
      %p132 = pnand %p130, %p131
      %p133 = pneg %p132
      // Predicated region
      $region9: #{complex_conv2d.1} parent=5 // pred_check
        _
      $region10: #{complex_conv2d.1} parent=5 // pred_check_branch
        %135 = sbr.rel (%p132) target = $region12
      $region11: #{complex_conv2d.1} parent=5 // pred_region
        %s136 = ssub.s32 %s9, 1
        // Predicated region
        $region13: #{complex_conv2d.1} parent=11 // pred_check
          %p137 = pneg %p47
        $region14: #{complex_conv2d.1} parent=11 // pred_check_branch
          %139 = sbr.rel (%p137) target = $region16
        $region15: #{complex_conv2d.1} parent=11 // pred_region
          %p140 = scmp.lt.s32.totalorder %s19, 0
          %s141 = scalar_select %p140, %s19, 0
          %s142 = smul.addr %s141, 4
          %s143 = scalar_lea.vmem %s0, %s142
        $region16: #{complex_conv2d.1} parent=11 // pred_fallthru
          _
        // Predicated region
        $region17: #{complex_conv2d.1} parent=11 // pred_check
          %p144 = pneg %p96
        $region18: #{complex_conv2d.1} parent=11 // pred_check_branch
          %146 = sbr.rel (%p144) target = $region20
        $region19: #{complex_conv2d.1} parent=11 // pred_region
          _
        $region20: #{complex_conv2d.1} parent=11 // pred_fallthru
          _
      $region12: #{complex_conv2d.1} parent=5 // pred_fallthru
        _
      %p147 = scmp.lt.s32.totalorder %s9, 4
      // Predicated region
      $region21: #{complex_conv2d.1} parent=5 // pred_check
        %p148 = pneg %p147
      $region22: #{complex_conv2d.1} parent=5 // pred_check_branch
        %150 = sbr.rel (%p148) target = $region24
      $region23: #{complex_conv2d.1} parent=5 // pred_region
        // Predicated region
        $region25: #{complex_conv2d.1} parent=23 // pred_check
          %p151 = pneg %p69
        $region26: #{complex_conv2d.1} parent=23 // pred_check_branch
          %153 = sbr.rel (%p151) target = $region28
        $region27: #{complex_conv2d.1} parent=23 // pred_region
          %s154 = sand.u32 %s59, 1
          %s155 = sand.u32 %s59, 1
          %s156 = smul.addr %s155, 40
          %s157 = scalar_lea.vmem [#allocation2], %s156
          %s158 = smul.u32 10, %s17
          %s159 = smul.addr %s158, 4
          %s160 = sadd.s32 %s16, %s159
          %s161 = smul.addr %s160, 4
          %s162 = scalar_lea.vmem %s1, %s161
          // Predicated region
          $region29: #{complex_conv2d.1} parent=27 // pred_check
            _
          $region30: #{complex_conv2d.1} parent=27 // pred_check_branch
            %164 = sbr.rel (0) target = $region32
          $region31: #{complex_conv2d.1} parent=27 // pred_region
            // Predicated region
            $region33: #{complex_conv2d.1} parent=31 // pred_check
              _
            $region34: #{complex_conv2d.1} parent=31 // pred_check_branch
              %166 = sbr.rel target = $region36
            $region35: #{complex_conv2d.1} parent=31 // pred_region
              // Predicated region
              $region48: #{complex_conv2d.1} parent=35 // pred_check
                _
              $region49: #{complex_conv2d.1} parent=35 // pred_check_branch
                %199 = sbr.rel (0) target = $region51
              $region50: #{complex_conv2d.1} parent=35 // pred_region
                loop: start=0, step=1, limit=1
                $region52: #{complex_conv2d.1} parent=50 // loop_pre_header
                  _
                $region53: #{complex_conv2d.1} parent=50 // loop_header
                  %s201 = sphi 0, %s205
                  %p202 = scmp.ge.s32.totalorder %s201, 1
                  %s206 = sphi %s162, %s162
                  %s207 = sphi %s157, %s157
                $region54: #{complex_conv2d.1} parent=50 // loop_header_branch
                  %204 = sbr.rel (%p202) target = $region58
                $region55: #{complex_conv2d.1} parent=50 // loop_body
                  _
                $region56: #{complex_conv2d.1} parent=50 // loop_footer
                  %s205 = sadd.s32 1, %s201
                $region57: #{complex_conv2d.1} parent=50 // loop_footer_branch
                  %200 = sbr.rel target = $region53
                $region58: #{complex_conv2d.1} parent=50 // loop_exit
                  _
                loop: start=0, step=1, limit=1
                $region59: #{complex_conv2d.1} parent=50 // loop_pre_header
                  _
                $region60: #{complex_conv2d.1} parent=50 // loop_header
                  %s210 = sphi 0, %s214
                  %p211 = scmp.ge.s32.totalorder %s210, 1
                  %s215 = sphi %s162, %s162
                  %s216 = sphi %s157, %s157
                $region61: #{complex_conv2d.1} parent=50 // loop_header_branch
                  %213 = sbr.rel (%p211) target = $region65
                $region62: #{complex_conv2d.1} parent=50 // loop_body
                  %v217 = vld [vmem:[%s215] sm:$0xf]
                  %218 = vst [vmem:[%s216] sm:$0xf] %v217
                  %v219 = vld [vmem:[%s215 + $0x10] sm:$0xf]
                  %220 = vst [vmem:[%s216 + $0x4] sm:$0xf] %v219
                  %v221 = vld [vmem:[%s215 + $0x20] sm:$0xf]
                  %222 = vst [vmem:[%s216 + $0x8] sm:$0xf] %v221
                  %v223 = vld [vmem:[%s215 + $0x30] sm:$0xf]
                  %224 = vst [vmem:[%s216 + $0xc] sm:$0xf] %v223
                  %v225 = vld [vmem:[%s215 + $0x40] sm:$0xf]
                  %226 = vst [vmem:[%s216 + $0x10] sm:$0xf] %v225
                  %v227 = vld [vmem:[%s215 + $0x50] sm:$0xf]
                  %228 = vst [vmem:[%s216 + $0x14] sm:$0xf] %v227
                  %v229 = vld [vmem:[%s215 + $0x60] sm:$0xf]
                  %230 = vst [vmem:[%s216 + $0x18] sm:$0xf] %v229
                  %v231 = vld [vmem:[%s215 + $0x70] sm:$0xf]
                  %232 = vst [vmem:[%s216 + $0x1c] sm:$0xf] %v231
                  %v233 = vld [vmem:[%s215 + $0x80] sm:$0xf]
                  %234 = vst [vmem:[%s216 + $0x20] sm:$0xf] %v233
                  %v235 = vld [vmem:[%s215 + $0x90] sm:$0xf]
                  %236 = vst [vmem:[%s216 + $0x24] sm:$0xf] %v235
                $region63: #{complex_conv2d.1} parent=50 // loop_footer
                  %s214 = sadd.s32 1, %s210
                $region64: #{complex_conv2d.1} parent=50 // loop_footer_branch
                  %209 = sbr.rel target = $region60
                $region65: #{complex_conv2d.1} parent=50 // loop_exit
                  _
              $region51: #{complex_conv2d.1} parent=35 // pred_fallthru
                _
            $region36: #{complex_conv2d.1} parent=31 // pred_fallthru
              _
            // Predicated region
            $region37: #{complex_conv2d.1} parent=31 // pred_check
              _
            $region38: #{complex_conv2d.1} parent=31 // pred_check_branch
              %168 = sbr.rel (0) target = $region40
            $region39: #{complex_conv2d.1} parent=31 // pred_region
              loop: start=0, step=1, limit=1
              $region41: #{complex_conv2d.1} parent=39 // loop_pre_header
                _
              $region42: #{complex_conv2d.1} parent=39 // loop_header
                %s171 = sphi 0, %s175
                %p172 = scmp.ge.s32.totalorder %s171, 1
                %s176 = sphi %s162, %s162
                %s177 = sphi %s157, %s157
              $region43: #{complex_conv2d.1} parent=39 // loop_header_branch
                %174 = sbr.rel (%p172) target = $region47
              $region44: #{complex_conv2d.1} parent=39 // loop_body
                %v178 = vld [vmem:[%s176] sm:$0xf]
                %179 = vst [vmem:[%s177] sm:$0xf] %v178
                %v180 = vld [vmem:[%s176 + $0x10] sm:$0xf]
                %181 = vst [vmem:[%s177 + $0x4] sm:$0xf] %v180
                %v182 = vld [vmem:[%s176 + $0x20] sm:$0xf]
                %183 = vst [vmem:[%s177 + $0x8] sm:$0xf] %v182
                %v184 = vld [vmem:[%s176 + $0x30] sm:$0xf]
                %185 = vst [vmem:[%s177 + $0xc] sm:$0xf] %v184
                %v186 = vld [vmem:[%s176 + $0x40] sm:$0xf]
                %187 = vst [vmem:[%s177 + $0x10] sm:$0xf] %v186
                %v188 = vld [vmem:[%s176 + $0x50] sm:$0xf]
                %189 = vst [vmem:[%s177 + $0x14] sm:$0xf] %v188
                %v190 = vld [vmem:[%s176 + $0x60] sm:$0xf]
                %191 = vst [vmem:[%s177 + $0x18] sm:$0xf] %v190
                %v192 = vld [vmem:[%s176 + $0x70] sm:$0xf]
                %193 = vst [vmem:[%s177 + $0x1c] sm:$0xf] %v192
                %v194 = vld [vmem:[%s176 + $0x80] sm:$0xf]
                %195 = vst [vmem:[%s177 + $0x20] sm:$0xf] %v194
                %v196 = vld [vmem:[%s176 + $0x90] sm:$0xf]
                %197 = vst [vmem:[%s177 + $0x24] sm:$0xf] %v196
              $region45: #{complex_conv2d.1} parent=39 // loop_footer
                %s175 = sadd.s32 1, %s171
              $region46: #{complex_conv2d.1} parent=39 // loop_footer_branch
                %170 = sbr.rel target = $region42
              $region47: #{complex_conv2d.1} parent=39 // loop_exit
                _
            $region40: #{complex_conv2d.1} parent=31 // pred_fallthru
              _
          $region32: #{complex_conv2d.1} parent=27 // pred_fallthru
            _
          %237 = vnop
        $region28: #{complex_conv2d.1} parent=23 // pred_fallthru
          _
      $region24: #{complex_conv2d.1} parent=5 // pred_fallthru
        _
      %p238 = scmp.le.s32.totalorder 1, %s9
      %p239 = scmp.lt.s32.totalorder %s9, 5
      %p240 = pnand %p238, %p239
      %p241 = pneg %p240
      // Predicated region
      $region66: #{complex_conv2d.1} parent=5 // pred_check
        _
      $region67: #{complex_conv2d.1} parent=5 // pred_check_branch
        %243 = sbr.rel (%p240) target = $region69
      $region68: #{complex_conv2d.1} parent=5 // pred_region
        %s244 = ssub.s32 %s9, 1
        %s245 = sand.u32 %s62, 1
        %s246 = sand.u32 %s62, 1
        %s247 = smul.addr %s246, 40
        %s248 = scalar_lea.vmem [#allocation2], %s247
        // Predicated region
        $region70: #{complex_conv2d.1} parent=68 // pred_check
          %p249 = pneg %p75
        $region71: #{complex_conv2d.1} parent=68 // pred_check_branch
          %251 = sbr.rel (%p249) target = $region73
        $region72: #{complex_conv2d.1} parent=68 // pred_region
          _
        $region73: #{complex_conv2d.1} parent=68 // pred_fallthru
          _
        %p252 = scmp.lt.s32.totalorder %s19, 0
        %s253 = scalar_select %p252, %s19, 0
        %s254 = smul.addr %s253, 4
        %s255 = scalar_lea.vmem %s0, %s254
        %p256 = pneg %p47
        %p257 = pneg %p44
        %s258 = sand.u32 %s62, 1
        %s259 = sand.u32 %s62, 1
        %s260 = smul.addr %s259, 40
        %s261 = scalar_lea.vmem [#allocation2], %s260
        %p262 = pneg %p75
        %p263 = pneg %p72
        %p264 = pneg %p96
        %p265 = pneg %p93
        %p266 = pneg %p122
        %p267 = pneg %p119
        %s268 = sand.u32 %s109, 1
        %s269 = sand.u32 %s109, 1
        %s270 = smul.addr %s269, 16
        %s271 = scalar_lea.vmem [#allocation3], %s270
        %p272 = scmp.lt.s32.totalorder %s19, 0
        %s273 = scalar_select %p272, %s19, 0
        %s274 = smul.addr %s273, 4
        %s275 = scalar_lea.vmem %s0, %s274
        %s276 = smul.u32 10, %s19
        %p278 = scmp.eq.s32.totalorder %s19, 0
        // Predicated region
        $region74: #{complex_conv2d.1} parent=68 // pred_check
          %p279 = pneg %p278
        $region75: #{complex_conv2d.1} parent=68 // pred_check_branch
          %281 = sbr.rel (%p279) target = $region77
        $region76: #{complex_conv2d.1} parent=68 // pred_region
          %v282 = vld [vmem:[%s2] sm:$0xff]
          %v283 = vld [vmem:[%s2 + $0x8] sm:$0xff]
          %285 = vset.pattern.permute.xlu0 0
          %286 = vperm.xlu0 %285, %v282
          %v287 = vpop.permute.xlu0 %286
          %290 = vset.pattern.permute.xlu0 0
          %291 = vperm.xlu0 %290, %v283
          %v292 = vpop.permute.xlu0 %291
          %294 = vst [vmem:[%s271] sm:$0xff] %v287
          %295 = vst [vmem:[%s271 + $0x8] sm:$0xff] %v292
        $region77: #{complex_conv2d.1} parent=68 // pred_fallthru
          _
        %v296 = vld [vmem:[%s271] sm:$0xff]
        %v297 = vld [vmem:[%s271 + $0x8] sm:$0xff]
        %v298 = vld [vmem:[%s275] sm:$0xf]
        %v299 = vld [vmem:[%s275 + $0x4] sm:$0xf]
        %v300 = vld [vmem:[%s248] sm:$0xf]
        %v301 = vld [vmem:[%s248 + $0x4] sm:$0xf]
        %v302 = vld [vmem:[%s248 + $0x8] sm:$0xf]
        %v303 = vld [vmem:[%s248 + $0xc] sm:$0xf]
        %v304 = vld [vmem:[%s248 + $0x10] sm:$0xf]
        %v305 = vld [vmem:[%s248 + $0x14] sm:$0xf]
        %v306 = vld [vmem:[%s248 + $0x18] sm:$0xf]
        %v307 = vld [vmem:[%s248 + $0x1c] sm:$0xf]
        %v308 = vld [vmem:[%s248 + $0x20] sm:$0xf]
        %v309 = vld [vmem:[%s248 + $0x24] sm:$0xf]
        %v312 = vunpack.c.l.b16 %v298
        %v313 = vunpack.c.l.b16 %v299
        %v314 = vpack.c.b16 %v313, %v312
        %v325 = vunpack.c.l.b16 %v300
        %v326 = vunpack.c.l.b16 %v301
        %v327 = vunpack.c.l.b16 %v302
        %v328 = vunpack.c.l.b16 %v303
        %v329 = vunpack.c.l.b16 %v304
        %v330 = vunpack.c.l.b16 %v305
        %v331 = vunpack.c.l.b16 %v306
        %v332 = vunpack.c.l.b16 %v307
        %v333 = vunpack.c.l.b16 %v308
        %v334 = vunpack.c.l.b16 %v309
        %v335 = vpack.c.b16 %v326, %v325
        %v336 = vpack.c.b16 %v328, %v327
        %v337 = vpack.c.b16 %v330, %v329
        %v338 = vpack.c.b16 %v332, %v331
        %v339 = vpack.c.b16 %v334, %v333
        %vm345 = vcmask 654336
        %v347 = vsel %vm345, %v314, 0
        %349 = vmatprep.subr.bf16.mxu0 0
        %350 = vmatpush1.bf16.msra.mxu0 %v335
        %351 = vmatprep.subr.bf16.mxu0 0
        %352 = vmatpush1.bf16.msra.mxu0 %v336
        %353 = vmatprep.subr.bf16.mxu0 0
        %354 = vmatpush1.bf16.msra.mxu0 %v337
        %355 = vmatprep.subr.bf16.mxu0 0
        %356 = vmatpush1.bf16.msra.mxu0 %v338
        %357 = vmatprep.subr.bf16.mxu0 0
        %358 = vmatpush1.bf16.msra.mxu0 %v339
        %359 = vmatprep.subr.bf16.mxu0 0
        %360 = vmatpush1.bf16.msra.mxu0 0
        %361 = vmatprep.subr.bf16.mxu0 0
        %362 = vmatpush1.bf16.msra.mxu0 0
        %363 = vmatprep.subr.bf16.mxu0 0
        %364 = vmatpush1.bf16.msra.mxu0 0
        %365 = vmatprep.subr.bf16.mxu0 0
        %366 = vmatpush1.bf16.msra.mxu0 0
        %367 = vmatprep.subr.bf16.mxu0 0
        %368 = vmatpush1.bf16.msra.mxu0 0
        %369 = vmatprep.subr.bf16.mxu0 0
        %370 = vmatpush1.bf16.msra.mxu0 0
        %371 = vmatprep.subr.bf16.mxu0 0
        %372 = vmatpush1.bf16.msra.mxu0 0
        %373 = vmatprep.subr.bf16.mxu0 0
        %374 = vmatpush1.bf16.msra.mxu0 0
        %375 = vmatprep.subr.bf16.mxu0 0
        %376 = vmatpush1.bf16.msra.mxu0 0
        %377 = vmatprep.subr.bf16.mxu0 0
        %378 = vmatpush1.bf16.msra.mxu0 0
        %379 = vmatprep.subr.bf16.mxu0 0
        %380 = vmatpush1.bf16.msra.mxu0 0
        %381 = vmatprep.mubr.bf16.mxu0 0
        %382 = vmatmul.mubr.bf16.gmra.mrb[0].mxu0 %v347
        %v383 = vpop.f32.mrb[0].mxu0
        %v384 = vadd.f32 0.0, %v383
        %v385 = vpop.f32.mrb[0].mxu0
        %v386 = vpop.f32.mrb[0].mxu0
        %v387 = vadd.f32 0.0, %v386
        %v388 = vpop.f32.mrb[0].mxu0
        %389 = vdwg.mxu0
        %v390 = vadd.f32 %v296, %v384
        %v391 = vadd.f32 %v297, %v387
        %392 = vst [vmem:[%s271] sm:$0xff] %v390
        %393 = vst [vmem:[%s271 + $0x8] sm:$0xff] %v391
        %s394 = sand.u32 %s109, 1
        %s395 = sand.u32 %s109, 1
        %s396 = smul.addr %s395, 16
        %s397 = scalar_lea.vmem [#allocation3], %s396
        // Predicated region
        $region78: #{complex_conv2d.1} parent=68 // pred_check
          %p398 = pneg %p119
        $region79: #{complex_conv2d.1} parent=68 // pred_check_branch
          %400 = sbr.rel (%p398) target = $region81
        $region80: #{complex_conv2d.1} parent=68 // pred_region
          %s401 = smul.addr %s18, 8
          %s402 = scalar_lea.vmem %s3, %s401
          // Predicated region
          $region82: #{complex_conv2d.1} parent=80 // pred_check
            _
          $region83: #{complex_conv2d.1} parent=80 // pred_check_branch
            %404 = sbr.rel (0) target = $region85
          $region84: #{complex_conv2d.1} parent=80 // pred_region
            // Predicated region
            $region86: #{complex_conv2d.1} parent=84 // pred_check
              _
            $region87: #{complex_conv2d.1} parent=84 // pred_check_branch
              %406 = sbr.rel (0) target = $region89
            $region88: #{complex_conv2d.1} parent=84 // pred_region
              // Predicated region
              $region101: #{complex_conv2d.1} parent=88 // pred_check
                _
              $region102: #{complex_conv2d.1} parent=88 // pred_check_branch
                %423 = sbr.rel (0) target = $region104
              $region103: #{complex_conv2d.1} parent=88 // pred_region
                loop: start=0, step=1, limit=1
                $region105: #{complex_conv2d.1} parent=103 // loop_pre_header
                  _
                $region106: #{complex_conv2d.1} parent=103 // loop_header
                  %s425 = sphi 0, %s429
                  %p426 = scmp.ge.s32.totalorder %s425, 1
                  %s430 = sphi %s397, %s397
                  %s431 = sphi %s402, %s402
                $region107: #{complex_conv2d.1} parent=103 // loop_header_branch
                  %428 = sbr.rel (%p426) target = $region111
                $region108: #{complex_conv2d.1} parent=103 // loop_body
                  %v432 = vld [vmem:[%s430] sm:$0xff]
                  %433 = vst [vmem:[%s431] sm:$0xff] %v432
                  %v434 = vld [vmem:[%s430 + $0x8] sm:$0xff]
                  %435 = vst [vmem:[%s431 + $0x20] sm:$0xff] %v434
                $region109: #{complex_conv2d.1} parent=103 // loop_footer
                  %s429 = sadd.s32 1, %s425
                $region110: #{complex_conv2d.1} parent=103 // loop_footer_branch
                  %424 = sbr.rel target = $region106
                $region111: #{complex_conv2d.1} parent=103 // loop_exit
                  _
              $region104: #{complex_conv2d.1} parent=88 // pred_fallthru
                _
              // Predicated region
              $region112: #{complex_conv2d.1} parent=88 // pred_check
                _
              $region113: #{complex_conv2d.1} parent=88 // pred_check_branch
                %437 = sbr.rel target = $region115
              $region114: #{complex_conv2d.1} parent=88 // pred_region
                _
              $region115: #{complex_conv2d.1} parent=88 // pred_fallthru
                _
            $region89: #{complex_conv2d.1} parent=84 // pred_fallthru
              _
            // Predicated region
            $region90: #{complex_conv2d.1} parent=84 // pred_check
              _
            $region91: #{complex_conv2d.1} parent=84 // pred_check_branch
              %408 = sbr.rel target = $region93
            $region92: #{complex_conv2d.1} parent=84 // pred_region
              loop: start=0, step=1, limit=1
              $region94: #{complex_conv2d.1} parent=92 // loop_pre_header
                _
              $region95: #{complex_conv2d.1} parent=92 // loop_header
                %s411 = sphi 0, %s415
                %p412 = scmp.ge.s32.totalorder %s411, 1
                %s416 = sphi %s397, %s397
                %s417 = sphi %s402, %s402
              $region96: #{complex_conv2d.1} parent=92 // loop_header_branch
                %414 = sbr.rel (%p412) target = $region100
              $region97: #{complex_conv2d.1} parent=92 // loop_body
                %v418 = vld [vmem:[%s416] sm:$0xff]
                %419 = vst [vmem:[%s417] sm:$0xff] %v418
                %v420 = vld [vmem:[%s416 + $0x8] sm:$0xff]
                %421 = vst [vmem:[%s417 + $0x20] sm:$0xff] %v420
              $region98: #{complex_conv2d.1} parent=92 // loop_footer
                %s415 = sadd.s32 1, %s411
              $region99: #{complex_conv2d.1} parent=92 // loop_footer_branch
                %410 = sbr.rel target = $region95
              $region100: #{complex_conv2d.1} parent=92 // loop_exit
                _
            $region93: #{complex_conv2d.1} parent=84 // pred_fallthru
              _
          $region85: #{complex_conv2d.1} parent=80 // pred_fallthru
            _
          %438 = vnop
        $region81: #{complex_conv2d.1} parent=68 // pred_fallthru
          _
      $region69: #{complex_conv2d.1} parent=5 // pred_fallthru
        _
      %p439 = scmp.le.s32.totalorder 2, %s9
      // Predicated region
      $region116: #{complex_conv2d.1} parent=5 // pred_check
        %p440 = pneg %p439
      $region117: #{complex_conv2d.1} parent=5 // pred_check_branch
        %442 = sbr.rel (%p440) target = $region119
      $region118: #{complex_conv2d.1} parent=5 // pred_region
        %s443 = ssub.s32 %s9, 2
        // Predicated region
        $region120: #{complex_conv2d.1} parent=118 // pred_check
          %p444 = pneg %p125
        $region121: #{complex_conv2d.1} parent=118 // pred_check_branch
          %446 = sbr.rel (%p444) target = $region123
        $region122: #{complex_conv2d.1} parent=118 // pred_region
          %s447 = sand.u32 %s110, 1
          %s448 = sand.u32 %s110, 1
          %s449 = smul.addr %s448, 16
          %s450 = scalar_lea.vmem [#allocation3], %s449
        $region123: #{complex_conv2d.1} parent=118 // pred_fallthru
          _
      $region119: #{complex_conv2d.1} parent=5 // pred_fallthru
        _
    $region6: #{complex_conv2d.1} parent=1 // loop_footer
      %s13 = sadd.s32 1, %s9
    $region7: #{complex_conv2d.1} parent=1 // loop_footer_branch
      %8 = sbr.rel target = $region3
    $region8: #{complex_conv2d.1} parent=1 // loop_exit
      _

</llo_original>
